<compile_context>
chip_gen: v7x
topology: tpu7x:2x2x1
jax: 0.10.0
libtpu: 0.0.40
codegen_flags: <defaults>
</compile_context>

<pallas_src>
import jax
import jax.numpy as jnp
from jax.experimental import pallas as pl
from jax.experimental.pallas import tpu as pltpu

_LANE = 128                                # lanes per row of the interleaved view
_DEFAULT_BLOCK_BYTES = 2 * 1024 * 1024     # ~2 MiB of input per grid step (v5e/v6e)
_V7X_BLOCK_BYTES = 6 * 1024 * 1024         # bigger steps on v7x (3.2 TB/s HBM)
_V7X_VMEM_LIMIT_BYTES = 48 * 1024 * 1024   # headroom under v7x's 64 MiB physical VMEM
_FLOOR_BLOCK_BYTES = 512 * 1024            # never shrink blocks below this for steps


def _poly_kernel(x_ref, o_ref):
    # x_ref / o_ref: (block_rows, 128) tiles of the interleaved flat layout.
    x = x_ref[...]
    c = x.shape[-1]                                     # 128 (static)

    lane = jax.lax.broadcasted_iota(jnp.int32, x.shape, 1)
    feat = lane & 3                                     # flat index % 4 == lane % 4

    # Neighbours inside each aligned 4-lane group (wrapped-around values at the
    # rotate boundary are never selected by the feat masks).
    p1 = pltpu.roll(x, 1, axis=1)                       # x[l-1]
    p2 = pltpu.roll(x, 2, axis=1)                       # x[l-2]
    p3 = pltpu.roll(x, 3, axis=1)                       # x[l-3]
    m1 = pltpu.roll(x, c - 1, axis=1)                   # x[l+1]
    m2 = pltpu.roll(x, c - 2, axis=1)                   # x[l+2]

    p1sq = p1 * p1
    y0 = x + m1 - m2 * m2 * m2         # feat 0:  a + b - c^3
    y1 = p1sq + x - m1 - m2            # feat 1:  a^2 + b - c - d
    y2 = x + p1sq - p2                 # feat 2: -a + b^2 + c
    y3 = -(p3 + p2)                    # feat 3: -a - b

    # Single full-width select chain + one lane-dense store (no concatenate).
    o_ref[...] = jnp.where(feat == 0, y0,
                 jnp.where(feat == 1, y1,
                 jnp.where(feat == 2, y2, y3)))


def _reference(x):
    """Pure-jnp reference formula (also used for tiny inputs / ragged tails)."""
    a, b, c, d = x[..., 0], x[..., 1], x[..., 2], x[..., 3]
    return jnp.stack([a + b - c ** 3,
                      a ** 2 + b - c - d,
                      -a + b ** 2 + c,
                      -a - b], axis=-1)


def _tpu_config():
    """(target_block_bytes, vmem_limit_bytes_or_None, min_grid_steps)."""
    try:
        kind = jax.devices()[0].device_kind.lower()
    except Exception:
        kind = ""
    if "7" in kind:   # v7x: 2 TCs, much faster HBM -> larger blocks, >=4 steps
        return _V7X_BLOCK_BYTES, _V7X_VMEM_LIMIT_BYTES, 4
    return _DEFAULT_BLOCK_BYTES, None, 2


def _run_pallas_2d(x2d, itemsize, n_samples):
    """Run the polynomial kernel on a 128-lane-aligned (rows, 128) view."""
    rows = x2d.shape[0]
    target_bytes, vmem_limit, min_steps = _tpu_config()

    sub = max(8, 32 // itemsize)               # sublane quantum: 8 fp32 / 16 bf16 / 32 int8
    row_bytes = _LANE * itemsize
    target_rows = max(sub, target_bytes // row_bytes)

    if rows <= target_rows:
        block_rows = rows                      # small/medium: one block, latency-bound
    else:
        floor_rows = max(sub, _FLOOR_BLOCK_BYTES // row_bytes)
        cap_rows = pl.cdiv(rows, min_steps)    # keep >= min_steps steps, but never
        block_rows = min(target_rows, max(cap_rows, floor_rows))   # below the floor
        block_rows = max(sub, (block_rows // sub) * sub)
        if block_rows >= rows:
            block_rows = rows
    grid = (pl.cdiv(rows, block_rows),)        # partial tail block masked by Pallas

    cp_kwargs = dict(dimension_semantics=("parallel",))
    if vmem_limit is not None:
        cp_kwargs["vmem_limit_bytes"] = vmem_limit

    cost = pl.CostEstimate(
        flops=13 * n_samples,
        transcendentals=0,
        bytes_accessed=2 * rows * _LANE * itemsize,
    )

    return pl.pallas_call(
        _poly_kernel,
        out_shape=jax.ShapeDtypeStruct(x2d.shape, x2d.dtype),
        grid=grid,
        in_specs=[pl.BlockSpec((block_rows, _LANE), lambda i: (i, 0))],
        out_specs=pl.BlockSpec((block_rows, _LANE), lambda i: (i, 0)),
        compiler_params=pltpu.CompilerParams(**cp_kwargs),
        cost_estimate=cost,
    )(x2d)


def nominal_polynomial_update(x):
    """x: (..., 4) array. Returns same shape/dtype, matching the torch module."""
    assert x.shape[-1] == 4, "last dim must be the 4-D polynomial state"
    orig_shape = x.shape
    total = x.size                      # = 4 * N (features interleaved in flat order)
    if total == 0:
        return x
    itemsize = jnp.dtype(x.dtype).itemsize

    flat = x.reshape(-1)                # contiguous -> metadata-only reshape
    tail_len = total % _LANE            # ragged iff N % 32 != 0
    main_len = total - tail_len

    if main_len == 0:
        # Fewer than 32 samples: latency-bound, pure jnp is strictly cheaper.
        return _reference(x)

    rows = main_len // _LANE
    main2d = (flat[:main_len] if tail_len else flat).reshape(rows, _LANE)
    out_main = _run_pallas_2d(main2d, itemsize, main_len // 4)

    if tail_len:
        # <= 31 samples: compute with the reference formula and stitch.
        # TODO(synk): the concatenate still copies the prefix once; a fully
        # copy-free ragged path would need output aliasing / in-place scatter.
        tail_out = _reference(flat[main_len:].reshape(-1, 4)).reshape(-1)
        out_flat = jnp.concatenate([out_main.reshape(-1), tail_out])
    else:
        out_flat = out_main.reshape(-1)
    return out_flat.reshape(orig_shape)


if __name__ == "__main__":
    key = jax.random.PRNGKey(0)
    # Small shapes consistent with the module's (..., state_dim=4) contract:
    #   (2, 8, 4)    : tiny -> pure-jnp path
    #   (33, 5, 4)   : ragged flat length -> Pallas prefix + jnp tail stitch
    #   (64, 40, 4)  : 128-aligned, single-block Pallas path
    #   (4500, 64, 4): multi-block grid with a masked partial tail block
    shapes = [(2, 8, 4), (33, 5, 4), (64, 40, 4), (4500, 64, 4)]
    for i, shp in enumerate(shapes):
        k = jax.random.fold_in(key, i)
        x = jax.random.normal(k, shp, dtype=jnp.float32)
        y = jax.block_until_ready(nominal_polynomial_update(x))
        y_ref = _reference(x)
        assert y.shape == x.shape and y.dtype == x.dtype
        assert jnp.allclose(y, y_ref, atol=1e-5, rtol=1e-5), f"mismatch for {shp}"
    print("KERNEL_OK")
</pallas_src>

<mosaic_0001>
module attributes {stable_mosaic.version = 11 : i64} {
  func.func @_poly_kernel(%arg0: i32, %arg1: memref<5x128xf32, #tpu.memory_space<vmem>>, %arg2: memref<5x128xf32, #tpu.memory_space<vmem>>) attributes {dimension_semantics = [#tpu.dimension_semantics<parallel>], iteration_bounds = array<i64: 1>, scalar_prefetch = 0 : i64, scratch_operands = 0 : i64, tpu.core_type = #tpu.core_type<tc>, window_params = [{transform_indices = @transform_0, window_bounds = array<i64: 5, 128>}, {transform_indices = @transform_1, window_bounds = array<i64: 5, 128>}]} {
    %c0 = arith.constant 0 : index
    %c0_0 = arith.constant 0 : index
    %0 = vector.load %arg1[%c0, %c0_0] : memref<5x128xf32, #tpu.memory_space<vmem>>, vector<5x128xf32>
    %1 = tpu.iota {dimensions = array<i32: 1>} : vector<5x128xi32>
    %c3_i32 = arith.constant 3 : i32
    %2 = vector.broadcast %c3_i32 : i32 to vector<5x128xi32>
    %3 = arith.andi %1, %2 : vector<5x128xi32>
    %c1_i32 = arith.constant 1 : i32
    %4 = tpu.dynamic_rotate %0 by %c1_i32 dim 1 : vector<5x128xf32>, i32 -> vector<5x128xf32>
    %c2_i32 = arith.constant 2 : i32
    %5 = tpu.dynamic_rotate %0 by %c2_i32 dim 1 : vector<5x128xf32>, i32 -> vector<5x128xf32>
    %c3_i32_1 = arith.constant 3 : i32
    %6 = tpu.dynamic_rotate %0 by %c3_i32_1 dim 1 : vector<5x128xf32>, i32 -> vector<5x128xf32>
    %c127_i32 = arith.constant 127 : i32
    %7 = tpu.dynamic_rotate %0 by %c127_i32 dim 1 : vector<5x128xf32>, i32 -> vector<5x128xf32>
    %c126_i32 = arith.constant 126 : i32
    %8 = tpu.dynamic_rotate %0 by %c126_i32 dim 1 : vector<5x128xf32>, i32 -> vector<5x128xf32>
    %9 = arith.mulf %4, %4 : vector<5x128xf32>
    %10 = arith.addf %0, %7 : vector<5x128xf32>
    %11 = arith.mulf %8, %8 : vector<5x128xf32>
    %12 = arith.mulf %11, %8 : vector<5x128xf32>
    %13 = arith.subf %10, %12 : vector<5x128xf32>
    %14 = arith.addf %9, %0 : vector<5x128xf32>
    %15 = arith.subf %14, %7 : vector<5x128xf32>
    %16 = arith.subf %15, %8 : vector<5x128xf32>
    %17 = arith.addf %0, %9 : vector<5x128xf32>
    %18 = arith.subf %17, %5 : vector<5x128xf32>
    %19 = arith.addf %6, %5 : vector<5x128xf32>
    %cst = arith.constant 0.000000e+00 : f32
    %20 = vector.broadcast %cst : f32 to vector<5x128xf32>
    %21 = arith.subf %20, %19 : vector<5x128xf32>
    %c0_i32 = arith.constant 0 : i32
    %22 = vector.broadcast %c0_i32 : i32 to vector<5x128xi32>
    %23 = arith.cmpi eq, %3, %22 : vector<5x128xi32>
    %c1_i32_2 = arith.constant 1 : i32
    %24 = vector.broadcast %c1_i32_2 : i32 to vector<5x128xi32>
    %25 = arith.cmpi eq, %3, %24 : vector<5x128xi32>
    %c2_i32_3 = arith.constant 2 : i32
    %26 = vector.broadcast %c2_i32_3 : i32 to vector<5x128xi32>
    %27 = arith.cmpi eq, %3, %26 : vector<5x128xi32>
    %28 = arith.select %27, %18, %21 : vector<5x128xi1>, vector<5x128xf32>
    %29 = arith.select %25, %16, %28 : vector<5x128xi1>, vector<5x128xf32>
    %30 = arith.select %23, %13, %29 : vector<5x128xi1>, vector<5x128xf32>
    %c0_4 = arith.constant 0 : index
    %c0_5 = arith.constant 0 : index
    %31 = vector.load %arg2[%c0_4, %c0_5] : memref<5x128xf32, #tpu.memory_space<vmem>>, vector<5x128xf32>
    tpu.vector_store %arg2[%c0_4, %c0_5], %30 {strides = array<i32>} : memref<5x128xf32, #tpu.memory_space<vmem>>, vector<5x128xf32>,
    return
  }
  func.func @transform_0(%arg0: i32) -> (i32, i32) {
    %c0_i32 = arith.constant 0 : i32
    %c0_i32_0 = arith.constant 0 : i32
    return %arg0, %c0_i32 : i32, i32
  }
  func.func @transform_1(%arg0: i32) -> (i32, i32) {
    %c0_i32 = arith.constant 0 : i32
    %c0_i32_0 = arith.constant 0 : i32
    return %arg0, %c0_i32 : i32, i32
  }
}

</mosaic_0001>

<llo_original>
// kernel: tpu_custom_call.1
$region0: #{tpu_custom_call.1}
  #allocation0 [shape = 'u32[]', space=smem, size = 0x4, offset = 0x4, fixed_abs, tag = 'smem constant byte address 0x4 - core index']
  #allocation1 [shape = 'u32[144,128]{1,0:T(1,128)}', space=vmem, size = 0x12000, scoped, tag = 'internal scratch']
  %s0 = inlined_call_operand.hbm [shape: f32[5,128], index: 0, kind: input, shape index: {}]
  %s1 = inlined_call_operand.hbm [shape: f32[5,128], index: 1, kind: output, shape index: {}]
  %s2 = sld [smem:[#allocation0]]
  $region18: #{tpu_custom_call.1} parent=0
    _
  %s4 = ssub.s32 1, %s2
  %s5 = scalar_select 0, %s4, %s2
  $region1: #{tpu_custom_call.1} parent=0
    #allocation2 [shape = 'u8[4096]{0}', space=vmem, size = 0x1000, scoped, tag = 'input window, operand 0, single buffered']
    #allocation3 [shape = 's32[1]{0}', space=sflag, size = 0x4, scoped, tag = 'scoped memory for tpu_custom_call.1']
    #allocation4 [shape = 's32[1]{0}', space=sflag, size = 0x4, scoped, tag = 'scoped memory for tpu_custom_call.1']
    #allocation5 [shape = 'u8[4096]{0}', space=vmem, size = 0x1000, scoped, tag = 'output window, operand 0, single buffered']
    %6 = vsyncpa [#allocation3], 0
    %7 = vsyncpa [#allocation4], 0
    // Predicated region
    $region2: #{tpu_custom_call.1} parent=1 // pred_check
      _
    $region3: #{tpu_custom_call.1} parent=1 // pred_check_branch
      %9 = sbr.rel (0) target = $region5
    $region4: #{tpu_custom_call.1} parent=1 // pred_region
      %s11 = ssub.s32 128, 128
      %12 = vsyncadd [#allocation3], %s11
      %s14 = sshll.u32 [#allocation2], 4
      %s15 = int_to_ptr.vmem [resolvable:$true] %s14
      %17 = dma.hbm_to_vmem [thread:$0]  %s0, 128, %s15, [#allocation3]
    $region5: #{tpu_custom_call.1} parent=1 // pred_fallthru
      _
    // Predicated region
    $region6: #{tpu_custom_call.1} parent=1 // pred_check
      _
    $region7: #{tpu_custom_call.1} parent=1 // pred_check_branch
      %19 = sbr.rel (0) target = $region9
    $region8: #{tpu_custom_call.1} parent=1 // pred_region
      %20 = dma.done [#allocation3], 128
    $region9: #{tpu_custom_call.1} parent=1 // pred_fallthru
      _
    %v21 = vld [vmem:[#allocation2] sm:$0x1f]
    %v22 = vlaneseq
    %v23 = vand.u32 %v22, 127
    %v24 = vand.u32 %v23, 3
    %25 = vrot.lane.b32.xlu0 %v21, 1
    %v26 = vpop.permute.xlu0 %25
    %27 = vrot.lane.b32.xlu0 %v21, 2
    %v28 = vpop.permute.xlu0 %27
    %29 = vrot.lane.b32.xlu0 %v21, 3
    %v30 = vpop.permute.xlu0 %29
    %31 = vrot.lane.b32.xlu0 %v21, 127
    %v32 = vpop.permute.xlu0 %31
    %33 = vrot.lane.b32.xlu0 %v21, 126
    %v34 = vpop.permute.xlu0 %33
    %v35 = vmul.f32 %v26, %v26
    %v36 = vadd.f32 %v21, %v32
    %v37 = vmul.f32 %v34, %v34
    %v38 = vmul.f32 %v37, %v34
    %v39 = vsub.f32 %v36, %v38
    %v40 = vadd.f32 %v35, %v21
    %v41 = vsub.f32 %v40, %v32
    %v42 = vsub.f32 %v41, %v34
    %v43 = vsub.f32 %v40, %v28
    %v44 = vadd.f32 %v30, %v28
    %v45 = vsub.f32 0.0, %v44
    %vm46 = vcmp.eq.s32.totalorder %v24, 0
    %vm47 = vcmp.eq.s32.totalorder %v24, 1
    %vm48 = vcmp.eq.s32.totalorder %v24, 2
    %v49 = vsel %vm48, %v43, %v45
    %v50 = vsel %vm47, %v42, %v49
    %v51 = vsel %vm46, %v39, %v50
    %52 = vst [vmem:[#allocation5] sm:$0x1f] %v51
    // Predicated region
    $region10: #{tpu_custom_call.1} parent=1 // pred_check
      _
    $region11: #{tpu_custom_call.1} parent=1 // pred_check_branch
      %54 = sbr.rel (0) target = $region13
    $region12: #{tpu_custom_call.1} parent=1 // pred_region
      %s56 = ssub.s32 128, 128
      %57 = vsyncadd [#allocation4], %s56
      %s59 = sshll.u32 [#allocation5], 4
      %s60 = int_to_ptr.vmem [resolvable:$true] %s59
      %62 = dma.vmem_to_hbm [thread:$0]  %s60, 128, %s1, [#allocation4]
    $region13: #{tpu_custom_call.1} parent=1 // pred_fallthru
      _
    // Predicated region
    $region14: #{tpu_custom_call.1} parent=1 // pred_check
      _
    $region15: #{tpu_custom_call.1} parent=1 // pred_check_branch
      %64 = sbr.rel (0) target = $region17
    $region16: #{tpu_custom_call.1} parent=1 // pred_region
      %65 = dma.done [#allocation4], 128
    $region17: #{tpu_custom_call.1} parent=1 // pred_fallthru
      _
    %66 = vsyncpa [#allocation3], 1
    %67 = vsyncpa [#allocation4], 1

</llo_original>
